<compile_context>
chip_gen: v7x
topology: tpu7x:2x2x1
jax: 0.10.0
libtpu: 0.0.40
codegen_flags: <defaults>
</compile_context>

<pallas_src>
from functools import partial

import jax
import jax.numpy as jnp
from jax.experimental import pallas as pl
from jax.experimental.pallas import tpu as pltpu


# ---------------------------------------------------------------------------
# Packed-parameter layout (single resident VMEM block, sublane-aligned rows).
# Weights are stored (out_features, in_features) -- PyTorch nn.Linear layout --
# and biases as (out_features, 1) columns.  Rows/cols between entries are
# guaranteed zero so the kernel can read 8-aligned, zero-padded slices.
# ---------------------------------------------------------------------------
R_W1, R_B1 = 0, 16      # W1  (10, 1),  b1 (10, 1)
R_W2, R_B2 = 32, 56     # W2  (20, 10), b2 (20, 1)
R_W3, R_B3 = 80, 104    # W3  (20, 20), b3 (20, 1)
R_W4, R_B4 = 128, 144   # W4  (10, 20), b4 (10, 1)
R_W5, R_B5 = 160, 176   # W5^T (10, 1), b5 (1, 1)
P_ROWS, P_COLS = 184, 128


def mlp_kernel(p_ref, x_ref, o_ref):
    x = x_ref[...]                                   # (1, B), batch on lanes

    # 8-aligned, zero-padded parameter slices (pad rows/cols are exact zeros).
    w1  = p_ref[R_W1:R_W1 + 16, 0:1]                 # (16, 1)   real 10x1
    b1  = p_ref[R_B1:R_B1 + 16, 0:1]                 # (16, 1)
    w2  = p_ref[R_W2:R_W2 + 24, 0:16]                # (24, 16)  real 20x10
    b2  = p_ref[R_B2:R_B2 + 24, 0:1]                 # (24, 1)
    w3  = p_ref[R_W3:R_W3 + 24, 0:24]                # (24, 24)  real 20x20
    b3  = p_ref[R_B3:R_B3 + 24, 0:1]                 # (24, 1)
    w4  = p_ref[R_W4:R_W4 + 16, 0:24]                # (16, 24)  real 10x20
    b4  = p_ref[R_B4:R_B4 + 16, 0:1]                 # (16, 1)
    w5t = p_ref[R_W5:R_W5 + 16, 0:1]                 # (16, 1)   real 10x1
    b5  = p_ref[R_B5:R_B5 + 1, 0:1]                  # (1, 1)

    # Layer 1 (1 -> 10): contraction dim = 1, skip the MXU; VPU broadcast FMA.
    h = jnp.maximum(w1 * x + b1, 0.0)                                     # (16, B)

    # Layers 2-4 (10->20->20->10): tiny weights, lane-full batch, MXU dots.
    # Padded rows/cols are zero and ReLU(0)=0, so padding stays inert.
    h = jnp.maximum(
        jnp.dot(w2, h, preferred_element_type=jnp.float32) + b2, 0.0)     # (24, B)
    h = jnp.maximum(
        jnp.dot(w3, h, preferred_element_type=jnp.float32) + b3, 0.0)     # (24, B)
    h = jnp.maximum(
        jnp.dot(w4, h, preferred_element_type=jnp.float32) + b4, 0.0)     # (16, B)

    # Layer 5 (10 -> 1): output dim = 1, VPU multiply + sublane reduce.
    out = jnp.sum(w5t * h, axis=0, keepdims=True) + b5                    # (1, B)

    o_ref[...] = out.astype(o_ref.dtype)


def _round_up(n, m):
    return ((n + m - 1) // m) * m


def pack_params(params):
    """Pack the 5 (W, b) pairs into one (P_ROWS, P_COLS) f32 block.

    Called once outside the hot path; all rows/cols not explicitly written
    remain exactly zero (the kernel's padded slices rely on this).
    """
    (w1, b1), (w2, b2), (w3, b3), (w4, b4), (w5, b5) = params
    p = jnp.zeros((P_ROWS, P_COLS), jnp.float32)

    def put(p, arr, row):
        arr = jnp.asarray(arr, jnp.float32)
        return p.at[row:row + arr.shape[0], 0:arr.shape[1]].set(arr)

    p = put(p, w1, R_W1)
    p = put(p, b1.reshape(-1, 1), R_B1)
    p = put(p, w2, R_W2)
    p = put(p, b2.reshape(-1, 1), R_B2)
    p = put(p, w3, R_W3)
    p = put(p, b3.reshape(-1, 1), R_B3)
    p = put(p, w4, R_W4)
    p = put(p, b4.reshape(-1, 1), R_B4)
    p = put(p, w5.T, R_W5)
    p = put(p, b5.reshape(-1, 1), R_B5)
    return p


@partial(jax.jit, static_argnames=("batch_tile", "num_cores"))
def function_approximator1(x, packed, *, batch_tile=32768, num_cores=1):
    """x: (N, 1) float32 (PyTorch nn.Linear convention).
    packed: pre-packed (P_ROWS, P_COLS) parameter block from pack_params()."""
    N = x.shape[0]

    # Lane-dense tiling: batch on the 128-lane axis.  Small N collapses to one
    # 128-wide block; large N uses big tiles (default up to 32K samples) so
    # the ~0.35 us per-grid-step overhead is negligible.  On multi-TC chips
    # (v7x) the tile is capped so grid_n >= num_cores and the "parallel" batch
    # axis can be sharded across TensorCores.
    tile = min(_round_up(batch_tile, 128), _round_up(N, 128))
    if num_cores > 1:
        per_core = _round_up(-(-N // num_cores), 128)
        tile = min(tile, max(128, per_core))
    n_pad = _round_up(N, tile)
    grid_n = n_pad // tile

    x_lanes = x.reshape(N, 1).T                           # (1, N)
    if n_pad != N:
        x_lanes = jnp.pad(x_lanes, ((0, 0), (0, n_pad - N)))

    out = pl.pallas_call(
        mlp_kernel,
        out_shape=jax.ShapeDtypeStruct((1, n_pad), x.dtype),
        grid_spec=pltpu.PrefetchScalarGridSpec(
            num_scalar_prefetch=0,
            grid=(grid_n,),
            in_specs=[
                # All weights/biases: one full-array block, resident in VMEM
                # (constant index_map -> DMA'd once, reused every step).
                pl.BlockSpec((P_ROWS, P_COLS), lambda i: (0, 0)),
                # Lane-dense batch tile of the input.
                pl.BlockSpec((1, tile), lambda i: (0, i)),
            ],
            out_specs=pl.BlockSpec((1, tile), lambda i: (0, i)),
        ),
        compiler_params=pltpu.CompilerParams(
            dimension_semantics=("parallel",),
            vmem_limit_bytes=48 * 1024 * 1024,
        ),
    )(packed, x_lanes)

    return out[:, :N].T                                    # (N, 1)


def _default_num_cores():
    """Best-effort TensorCores-per-chip guess (v7x has 2, v5e/v6e have 1)."""
    try:
        kind = jax.devices()[0].device_kind.lower()
        if "v7" in kind:
            return 2
    except Exception:
        pass
    return 1


def init_params(key):
    """Deterministic init matching FunctionApproximator1's layer shapes
    (PyTorch layout: W (out, in), b (out,))."""
    dims = [(1, 10), (10, 20), (20, 20), (20, 10), (10, 1)]
    params = []
    for fan_in, fan_out in dims:
        key, kw, kb = jax.random.split(key, 3)
        bound = 1.0 / (fan_in ** 0.5)
        w = jax.random.uniform(kw, (fan_out, fan_in), jnp.float32, -bound, bound)
        b = jax.random.uniform(kb, (fan_out,), jnp.float32, -bound, bound)
        params.append((w, b))
    return params


def reference_mlp(x, params):
    h = x
    for i, (w, b) in enumerate(params):
        h = h @ w.T + b
        if i < len(params) - 1:
            h = jnp.maximum(h, 0.0)
    return h


if __name__ == "__main__":
    key = jax.random.PRNGKey(0)
    key, kx1, kx2 = jax.random.split(key, 3)

    params = init_params(key)
    packed = pack_params(params)          # packed once, outside the hot path
    num_cores = _default_num_cores()

    # Small, single-tile case.
    N1 = 64
    x1 = jax.random.normal(kx1, (N1, 1), jnp.float32)
    out1 = jax.block_until_ready(
        function_approximator1(x1, packed, num_cores=num_cores))
    ref1 = reference_mlp(x1, params)
    assert out1.shape == (N1, 1)
    assert jnp.allclose(out1, ref1, atol=1e-5, rtol=1e-5)

    # Non-multiple-of-128 case to exercise the padding / slice path.
    N2 = 333
    x2 = jax.random.normal(kx2, (N2, 1), jnp.float32)
    out2 = jax.block_until_ready(
        function_approximator1(x2, packed, num_cores=num_cores))
    ref2 = reference_mlp(x2, params)
    assert out2.shape == (N2, 1)
    assert jnp.allclose(out2, ref2, atol=1e-5, rtol=1e-5)

    print("KERNEL_OK")
</pallas_src>

<mosaic_0001>
module attributes {stable_mosaic.version = 11 : i64} {
  func.func @mlp_kernel(%arg0: i32, %arg1: memref<184x128xf32, #tpu.memory_space<vmem>>, %arg2: memref<1x128xf32, #tpu.memory_space<vmem>>, %arg3: memref<1x128xf32, #tpu.memory_space<vmem>>) attributes {dimension_semantics = [#tpu.dimension_semantics<parallel>], iteration_bounds = array<i64: 1>, scalar_prefetch = 0 : i64, scratch_operands = 0 : i64, tpu.core_type = #tpu.core_type<tc>, window_params = [{pipeline_mode = #tpu.pipeline_mode<synchronous>, transform_indices = @transform_0, window_bounds = array<i64: 184, 128>}, {transform_indices = @transform_1, window_bounds = array<i64: 1, 128>}, {transform_indices = @transform_2, window_bounds = array<i64: 1, 128>}]} {
    %c0 = arith.constant 0 : index
    %c0_0 = arith.constant 0 : index
    %0 = vector.load %arg2[%c0, %c0_0] : memref<1x128xf32, #tpu.memory_space<vmem>>, vector<1x128xf32>
    %c0_1 = arith.constant 0 : index
    %c0_2 = arith.constant 0 : index
    %1 = vector.load %arg1[%c0_1, %c0_2] : memref<184x128xf32, #tpu.memory_space<vmem>>, vector<16x1xf32>
    %c16 = arith.constant 16 : index
    %c0_3 = arith.constant 0 : index
    %2 = vector.load %arg1[%c16, %c0_3] : memref<184x128xf32, #tpu.memory_space<vmem>>, vector<16x1xf32>
    %c32 = arith.constant 32 : index
    %c0_4 = arith.constant 0 : index
    %3 = vector.load %arg1[%c32, %c0_4] : memref<184x128xf32, #tpu.memory_space<vmem>>, vector<24x16xf32>
    %c56 = arith.constant 56 : index
    %c0_5 = arith.constant 0 : index
    %4 = vector.load %arg1[%c56, %c0_5] : memref<184x128xf32, #tpu.memory_space<vmem>>, vector<24x1xf32>
    %c80 = arith.constant 80 : index
    %c0_6 = arith.constant 0 : index
    %5 = vector.load %arg1[%c80, %c0_6] : memref<184x128xf32, #tpu.memory_space<vmem>>, vector<24x24xf32>
    %c104 = arith.constant 104 : index
    %c0_7 = arith.constant 0 : index
    %6 = vector.load %arg1[%c104, %c0_7] : memref<184x128xf32, #tpu.memory_space<vmem>>, vector<24x1xf32>
    %c128 = arith.constant 128 : index
    %c0_8 = arith.constant 0 : index
    %7 = vector.load %arg1[%c128, %c0_8] : memref<184x128xf32, #tpu.memory_space<vmem>>, vector<16x24xf32>
    %c144 = arith.constant 144 : index
    %c0_9 = arith.constant 0 : index
    %8 = vector.load %arg1[%c144, %c0_9] : memref<184x128xf32, #tpu.memory_space<vmem>>, vector<16x1xf32>
    %c160 = arith.constant 160 : index
    %c0_10 = arith.constant 0 : index
    %9 = vector.load %arg1[%c160, %c0_10] : memref<184x128xf32, #tpu.memory_space<vmem>>, vector<16x1xf32>
    %c176 = arith.constant 176 : index
    %c0_11 = arith.constant 0 : index
    %10 = vector.load %arg1[%c176, %c0_11] : memref<184x128xf32, #tpu.memory_space<vmem>>, vector<1x1xf32>
    %11 = vector.broadcast %1 : vector<16x1xf32> to vector<16x128xf32>
    %12 = vector.broadcast %0 : vector<1x128xf32> to vector<16x128xf32>
    %13 = arith.mulf %11, %12 : vector<16x128xf32>
    %14 = vector.broadcast %2 : vector<16x1xf32> to vector<16x128xf32>
    %15 = arith.addf %13, %14 : vector<16x128xf32>
    %cst = arith.constant 0.000000e+00 : f32
    %16 = vector.broadcast %cst : f32 to vector<16x128xf32>
    %17 = arith.maximumf %15, %16 : vector<16x128xf32>
    %cst_12 = arith.constant dense<0.000000e+00> : vector<24x128xf32>
    %18 = tpu.matmul %3, %17, %cst_12 {dimension_numbers = #tpu.dot_dimension_numbers<[1], [0], [0], [1], [0, 0, 1, 1], [], []>} : vector<24x16xf32>, vector<16x128xf32>, vector<24x128xf32> -> vector<24x128xf32>
    %19 = vector.broadcast %4 : vector<24x1xf32> to vector<24x128xf32>
    %20 = arith.addf %18, %19 : vector<24x128xf32>
    %cst_13 = arith.constant 0.000000e+00 : f32
    %21 = vector.broadcast %cst_13 : f32 to vector<24x128xf32>
    %22 = arith.maximumf %20, %21 : vector<24x128xf32>
    %cst_14 = arith.constant dense<0.000000e+00> : vector<24x128xf32>
    %23 = tpu.matmul %5, %22, %cst_14 {dimension_numbers = #tpu.dot_dimension_numbers<[1], [0], [0], [1], [0, 0, 1, 1], [], []>} : vector<24x24xf32>, vector<24x128xf32>, vector<24x128xf32> -> vector<24x128xf32>
    %24 = vector.broadcast %6 : vector<24x1xf32> to vector<24x128xf32>
    %25 = arith.addf %23, %24 : vector<24x128xf32>
    %cst_15 = arith.constant 0.000000e+00 : f32
    %26 = vector.broadcast %cst_15 : f32 to vector<24x128xf32>
    %27 = arith.maximumf %25, %26 : vector<24x128xf32>
    %cst_16 = arith.constant dense<0.000000e+00> : vector<16x128xf32>
    %28 = tpu.matmul %7, %27, %cst_16 {dimension_numbers = #tpu.dot_dimension_numbers<[1], [0], [0], [1], [0, 0, 1, 1], [], []>} : vector<16x24xf32>, vector<24x128xf32>, vector<16x128xf32> -> vector<16x128xf32>
    %29 = vector.broadcast %8 : vector<16x1xf32> to vector<16x128xf32>
    %30 = arith.addf %28, %29 : vector<16x128xf32>
    %cst_17 = arith.constant 0.000000e+00 : f32
    %31 = vector.broadcast %cst_17 : f32 to vector<16x128xf32>
    %32 = arith.maximumf %30, %31 : vector<16x128xf32>
    %33 = vector.broadcast %9 : vector<16x1xf32> to vector<16x128xf32>
    %34 = arith.mulf %33, %32 : vector<16x128xf32>
    %cst_18 = arith.constant dense<0.000000e+00> : vector<128xf32>
    %35 = vector.multi_reduction <add>, %34, %cst_18 [0] : vector<16x128xf32> to vector<128xf32>
    %36 = vector.shape_cast %35 : vector<128xf32> to vector<1x128xf32>
    %37 = vector.broadcast %10 : vector<1x1xf32> to vector<1x128xf32>
    %38 = arith.addf %36, %37 : vector<1x128xf32>
    %c0_19 = arith.constant 0 : index
    %c0_20 = arith.constant 0 : index
    %39 = vector.load %arg3[%c0_19, %c0_20] : memref<1x128xf32, #tpu.memory_space<vmem>>, vector<1x128xf32>
    tpu.vector_store %arg3[%c0_19, %c0_20], %38 {strides = array<i32>} : memref<1x128xf32, #tpu.memory_space<vmem>>, vector<1x128xf32>,
    return
  }
  func.func @transform_0(%arg0: i32) -> (i32, i32) {
    %c0_i32 = arith.constant 0 : i32
    %c0_i32_0 = arith.constant 0 : i32
    %c0_i32_1 = arith.constant 0 : i32
    return %c0_i32, %c0_i32_0 : i32, i32
  }
  func.func @transform_1(%arg0: i32) -> (i32, i32) {
    %c0_i32 = arith.constant 0 : i32
    %c0_i32_0 = arith.constant 0 : i32
    return %c0_i32, %arg0 : i32, i32
  }
  func.func @transform_2(%arg0: i32) -> (i32, i32) {
    %c0_i32 = arith.constant 0 : i32
    %c0_i32_0 = arith.constant 0 : i32
    return %c0_i32, %arg0 : i32, i32
  }
}

</mosaic_0001>

<llo_original>
// kernel: function_approximator1.1
$region0: #{function_approximator1.1}
  #allocation0 [shape = 'u32[]', space=smem, size = 0x4, offset = 0x4, fixed_abs, tag = 'smem constant byte address 0x4 - core index']
  #allocation1 [shape = 'u32[144,128]{1,0:T(1,128)}', space=vmem, size = 0x12000, scoped, tag = 'internal scratch']
  %s0 = inlined_call_operand.hbm [shape: f32[184,128], index: 0, kind: input, shape index: {}]
  %s1 = inlined_call_operand.vmem [shape: f32[1,128], index: 1, kind: input, shape index: {}]
  %s2 = inlined_call_operand.vmem [shape: f32[1,128], index: 2, kind: output, shape index: {}]
  %s3 = sld [smem:[#allocation0]]
  $region22: #{function_approximator1.1} parent=0
    _
  %s5 = ssub.s32 1, %s3
  %s6 = scalar_select 0, %s5, %s3
  $region1: #{function_approximator1.1} parent=0
    #allocation2 [shape = 'u8[94208]{0}', space=vmem, size = 0x17000, scoped, tag = 'input window, operand 0, single buffered']
    #allocation3 [shape = 's32[1]{0}', space=sflag, size = 0x4, scoped, tag = 'scoped memory for function_approximator1.1']
    %7 = vsyncpa [#allocation3], 0
    // Predicated region
    $region2: #{function_approximator1.1} parent=1 // pred_check
      _
    $region3: #{function_approximator1.1} parent=1 // pred_check_branch
      %9 = sbr.rel (0) target = $region5
    $region4: #{function_approximator1.1} parent=1 // pred_region
      %s11 = ssub.s32 2944, 2944
      %12 = vsyncadd [#allocation3], %s11
      %s13 = sshll.u32 [#allocation2], 4
      %s14 = int_to_ptr.vmem [resolvable:$true] %s13
      %19 = dma.hbm_to_vmem [thread:$0]  %s0, 2944, %s14, [#allocation3], 128, 128, 8
    $region5: #{function_approximator1.1} parent=1 // pred_fallthru
      _
    // Predicated region
    $region6: #{function_approximator1.1} parent=1 // pred_check
      _
    $region7: #{function_approximator1.1} parent=1 // pred_check_branch
      %21 = sbr.rel (0) target = $region9
    $region8: #{function_approximator1.1} parent=1 // pred_region
      _
    $region9: #{function_approximator1.1} parent=1 // pred_fallthru
      _
    // Predicated region
    $region10: #{function_approximator1.1} parent=1 // pred_check
      _
    $region11: #{function_approximator1.1} parent=1 // pred_check_branch
      %23 = sbr.rel (0) target = $region13
    $region12: #{function_approximator1.1} parent=1 // pred_region
      %24 = dma.done [#allocation3], 2944
    $region13: #{function_approximator1.1} parent=1 // pred_fallthru
      _
    %v25 = vld [vmem:[%s1] sm:$0x1]
    %v26 = vld [vmem:[#allocation2] sm:$0xff]
    %v27 = vld [vmem:[#allocation2 + $0x8] sm:$0xff]
    %v28 = vld [vmem:[#allocation2 + $0x10] sm:$0xff]
    %v29 = vld [vmem:[#allocation2 + $0x18] sm:$0xff]
    %v30 = vld [vmem:[#allocation2 + $0x20] sm:$0xff]
    %v31 = vld [vmem:[#allocation2 + $0x28] sm:$0xff]
    %v32 = vld [vmem:[#allocation2 + $0x30] sm:$0xff]
    %v33 = vld [vmem:[#allocation2 + $0x38] sm:$0xff]
    %v34 = vld [vmem:[#allocation2 + $0x40] sm:$0xff]
    %v35 = vld [vmem:[#allocation2 + $0x48] sm:$0xff]
    %v36 = vld [vmem:[#allocation2 + $0x50] sm:$0xff]
    %v37 = vld [vmem:[#allocation2 + $0x58] sm:$0xff]
    %v38 = vld [vmem:[#allocation2 + $0x60] sm:$0xff]
    %v39 = vld [vmem:[#allocation2 + $0x68] sm:$0xff]
    %v40 = vld [vmem:[#allocation2 + $0x70] sm:$0xff]
    %v41 = vld [vmem:[#allocation2 + $0x78] sm:$0xff]
    %v42 = vld [vmem:[#allocation2 + $0x80] sm:$0xff]
    %v43 = vld [vmem:[#allocation2 + $0x88] sm:$0xff]
    %v44 = vld [vmem:[#allocation2 + $0x90] sm:$0xff]
    %v45 = vld [vmem:[#allocation2 + $0x98] sm:$0xff]
    %v46 = vld [vmem:[#allocation2 + $0xa0] sm:$0xff]
    %v47 = vld [vmem:[#allocation2 + $0xa8] sm:$0xff]
    %v48 = vld [vmem:[#allocation2 + $0xb0] sm:$0x1]
    %50 = vset.pattern.permute.xlu0 0
    %51 = vperm.xlu0 %50, %v26
    %v52 = vpop.permute.xlu0 %51
    %55 = vset.pattern.permute.xlu0 0
    %56 = vperm.xlu0 %55, %v27
    %v57 = vpop.permute.xlu0 %56
    %v60 = vlaneseq
    %v61 = vshrl.u32 %v60, 7
    %v62 = vsub.s32 0, %v61
    %v63 = vrot.slane %v25, %v62
    %v65 = vmul.f32 %v52, %v63
    %v66 = vmul.f32 %v57, %v63
    %68 = vset.pattern.permute.xlu0 0
    %69 = vperm.xlu0 %68, %v28
    %v70 = vpop.permute.xlu0 %69
    %73 = vset.pattern.permute.xlu0 0
    %74 = vperm.xlu0 %73, %v29
    %v75 = vpop.permute.xlu0 %74
    %v77 = vadd.f32 %v65, %v70
    %v78 = vadd.f32 %v66, %v75
    %v79 = vmax.f32 %v77, 0.0
    %v80 = vmax.f32 %v78, 0.0
    %82 = vset.pattern.permute.xlu0 0
    %83 = vperm.xlu0 %82, %v33
    %v84 = vpop.permute.xlu0 %83
    %87 = vset.pattern.permute.xlu0 0
    %88 = vperm.xlu0 %87, %v34
    %v89 = vpop.permute.xlu0 %88
    %92 = vset.pattern.permute.xlu0 0
    %93 = vperm.xlu0 %92, %v35
    %v94 = vpop.permute.xlu0 %93
    %vm96 = vcmask 130048
    %v98 = vsel %vm96, %v30, 0
    %v101 = vsel %vm96, %v31, 0
    %v104 = vsel %vm96, %v32, 0
    %106 = vmatprep.subr.mxu0 0.0
    %107 = vmatpush1.msra.mxu0 %v79
    %108 = vmatprep.subr.mxu0 0.0
    %109 = vmatpush1.msra.mxu0 %v80
    %110 = vmatprep.subr.mxu0 0.0
    %111 = vmatpush1.msra.mxu0 0.0
    %112 = vmatprep.subr.mxu0 0.0
    %113 = vmatpush1.msra.mxu0 0.0
    %114 = vmatprep.subr.mxu0 0.0
    %115 = vmatpush1.msra.mxu0 0.0
    %116 = vmatprep.subr.mxu0 0.0
    %117 = vmatpush1.msra.mxu0 0.0
    %118 = vmatprep.subr.mxu0 0.0
    %119 = vmatpush1.msra.mxu0 0.0
    %120 = vmatprep.subr.mxu0 0.0
    %121 = vmatpush1.msra.mxu0 0.0
    %122 = vmatprep.subr.mxu0 0.0
    %123 = vmatpush1.msra.mxu0 0.0
    %124 = vmatprep.subr.mxu0 0.0
    %125 = vmatpush1.msra.mxu0 0.0
    %126 = vmatprep.subr.mxu0 0.0
    %127 = vmatpush1.msra.mxu0 0.0
    %128 = vmatprep.subr.mxu0 0.0
    %129 = vmatpush1.msra.mxu0 0.0
    %130 = vmatprep.subr.mxu0 0.0
    %131 = vmatpush1.msra.mxu0 0.0
    %132 = vmatprep.subr.mxu0 0.0
    %133 = vmatpush1.msra.mxu0 0.0
    %134 = vmatprep.subr.mxu0 0.0
    %135 = vmatpush1.msra.mxu0 0.0
    %136 = vmatprep.subr.mxu0 0.0
    %137 = vmatpush1.msra.mxu0 0.0
    %138 = vmatprep.subr.mxu0 0.0
    %139 = vmatpush1.msra.mxu0 0.0
    %140 = vmatprep.subr.mxu0 0.0
    %141 = vmatpush1.msra.mxu0 0.0
    %142 = vmatprep.subr.mxu0 0.0
    %143 = vmatpush1.msra.mxu0 0.0
    %144 = vmatprep.subr.mxu0 0.0
    %145 = vmatpush1.msra.mxu0 0.0
    %146 = vmatprep.subr.mxu0 0.0
    %147 = vmatpush1.msra.mxu0 0.0
    %148 = vmatprep.subr.mxu0 0.0
    %149 = vmatpush1.msra.mxu0 0.0
    %150 = vmatprep.subr.mxu0 0.0
    %151 = vmatpush1.msra.mxu0 0.0
    %152 = vmatprep.subr.mxu0 0.0
    %153 = vmatpush1.msra.mxu0 0.0
    %154 = vmatprep.subr.mxu0 0.0
    %155 = vmatpush1.msra.mxu0 0.0
    %156 = vmatprep.subr.mxu0 0.0
    %157 = vmatpush1.msra.mxu0 0.0
    %158 = vmatprep.subr.mxu0 0.0
    %159 = vmatpush1.msra.mxu0 0.0
    %160 = vmatprep.subr.mxu0 0.0
    %161 = vmatpush1.msra.mxu0 0.0
    %162 = vmatprep.subr.mxu0 0.0
    %163 = vmatpush1.msra.mxu0 0.0
    %164 = vmatprep.subr.mxu0 0.0
    %165 = vmatpush1.msra.mxu0 0.0
    %166 = vmatprep.subr.mxu0 0.0
    %167 = vmatpush1.msra.mxu0 0.0
    %168 = vmatprep.subr.mxu0 0.0
    %169 = vmatpush1.msra.mxu0 0.0
    %170 = vmatprep.mubr.f32.mxu0 0.0
    %171 = vmatmul.mubr.f32.gmra.mrb[0].mxu0 %v98
    %v172 = vpop.f32.mrb[0].mxu0
    %v173 = vadd.f32 %v84, %v172
    %v174 = vpop.f32.mrb[0].mxu0
    %175 = vmatprep.mubr.f32.mxu0 0.0
    %176 = vmatmul.mubr.f32.gmra.mrb[0].mxu0 %v101
    %v177 = vpop.f32.mrb[0].mxu0
    %v178 = vadd.f32 %v89, %v177
    %v179 = vpop.f32.mrb[0].mxu0
    %180 = vmatprep.mubr.f32.mxu0 0.0
    %181 = vmatmul.mubr.f32.gmra.mrb[0].mxu0 %v104
    %v182 = vpop.f32.mrb[0].mxu0
    %v183 = vadd.f32 %v94, %v182
    %v184 = vpop.f32.mrb[0].mxu0
    %185 = vdwg.mxu0
    %v186 = vmax.f32 %v173, 0.0
    %v187 = vmax.f32 %v178, 0.0
    %v188 = vmax.f32 %v183, 0.0
    %190 = vset.pattern.permute.xlu0 0
    %191 = vperm.xlu0 %190, %v39
    %v192 = vpop.permute.xlu0 %191
    %195 = vset.pattern.permute.xlu0 0
    %196 = vperm.xlu0 %195, %v40
    %v197 = vpop.permute.xlu0 %196
    %200 = vset.pattern.permute.xlu0 0
    %201 = vperm.xlu0 %200, %v41
    %v202 = vpop.permute.xlu0 %201
    %vm204 = vcmask 195584
    %v206 = vsel %vm204, %v36, 0
    %v209 = vsel %vm204, %v37, 0
    %v212 = vsel %vm204, %v38, 0
    %214 = vmatprep.subr.mxu0 0.0
    %215 = vmatpush1.msra.mxu0 %v186
    %216 = vmatprep.subr.mxu0 0.0
    %217 = vmatpush1.msra.mxu0 %v187
    %218 = vmatprep.subr.mxu0 0.0
    %219 = vmatpush1.msra.mxu0 %v188
    %220 = vmatprep.subr.mxu0 0.0
    %221 = vmatpush1.msra.mxu0 0.0
    %222 = vmatprep.subr.mxu0 0.0
    %223 = vmatpush1.msra.mxu0 0.0
    %224 = vmatprep.subr.mxu0 0.0
    %225 = vmatpush1.msra.mxu0 0.0
    %226 = vmatprep.subr.mxu0 0.0
    %227 = vmatpush1.msra.mxu0 0.0
    %228 = vmatprep.subr.mxu0 0.0
    %229 = vmatpush1.msra.mxu0 0.0
    %230 = vmatprep.subr.mxu0 0.0
    %231 = vmatpush1.msra.mxu0 0.0
    %232 = vmatprep.subr.mxu0 0.0
    %233 = vmatpush1.msra.mxu0 0.0
    %234 = vmatprep.subr.mxu0 0.0
    %235 = vmatpush1.msra.mxu0 0.0
    %236 = vmatprep.subr.mxu0 0.0
    %237 = vmatpush1.msra.mxu0 0.0
    %238 = vmatprep.subr.mxu0 0.0
    %239 = vmatpush1.msra.mxu0 0.0
    %240 = vmatprep.subr.mxu0 0.0
    %241 = vmatpush1.msra.mxu0 0.0
    %242 = vmatprep.subr.mxu0 0.0
    %243 = vmatpush1.msra.mxu0 0.0
    %244 = vmatprep.subr.mxu0 0.0
    %245 = vmatpush1.msra.mxu0 0.0
    %246 = vmatprep.subr.mxu0 0.0
    %247 = vmatpush1.msra.mxu0 0.0
    %248 = vmatprep.subr.mxu0 0.0
    %249 = vmatpush1.msra.mxu0 0.0
    %250 = vmatprep.subr.mxu0 0.0
    %251 = vmatpush1.msra.mxu0 0.0
    %252 = vmatprep.subr.mxu0 0.0
    %253 = vmatpush1.msra.mxu0 0.0
    %254 = vmatprep.subr.mxu0 0.0
    %255 = vmatpush1.msra.mxu0 0.0
    %256 = vmatprep.subr.mxu0 0.0
    %257 = vmatpush1.msra.mxu0 0.0
    %258 = vmatprep.subr.mxu0 0.0
    %259 = vmatpush1.msra.mxu0 0.0
    %260 = vmatprep.subr.mxu0 0.0
    %261 = vmatpush1.msra.mxu0 0.0
    %262 = vmatprep.subr.mxu0 0.0
    %263 = vmatpush1.msra.mxu0 0.0
    %264 = vmatprep.subr.mxu0 0.0
    %265 = vmatpush1.msra.mxu0 0.0
    %266 = vmatprep.subr.mxu0 0.0
    %267 = vmatpush1.msra.mxu0 0.0
    %268 = vmatprep.subr.mxu0 0.0
    %269 = vmatpush1.msra.mxu0 0.0
    %270 = vmatprep.subr.mxu0 0.0
    %271 = vmatpush1.msra.mxu0 0.0
    %272 = vmatprep.subr.mxu0 0.0
    %273 = vmatpush1.msra.mxu0 0.0
    %274 = vmatprep.subr.mxu0 0.0
    %275 = vmatpush1.msra.mxu0 0.0
    %276 = vmatprep.subr.mxu0 0.0
    %277 = vmatpush1.msra.mxu0 0.0
    %278 = vmatprep.mubr.f32.mxu0 0.0
    %279 = vmatmul.mubr.f32.gmra.mrb[0].mxu0 %v206
    %v280 = vpop.f32.mrb[0].mxu0
    %v281 = vadd.f32 %v192, %v280
    %v282 = vpop.f32.mrb[0].mxu0
    %283 = vmatprep.mubr.f32.mxu0 0.0
    %284 = vmatmul.mubr.f32.gmra.mrb[0].mxu0 %v209
    %v285 = vpop.f32.mrb[0].mxu0
    %v286 = vadd.f32 %v197, %v285
    %v287 = vpop.f32.mrb[0].mxu0
    %288 = vmatprep.mubr.f32.mxu0 0.0
    %289 = vmatmul.mubr.f32.gmra.mrb[0].mxu0 %v212
    %v290 = vpop.f32.mrb[0].mxu0
    %v291 = vadd.f32 %v202, %v290
    %v292 = vpop.f32.mrb[0].mxu0
    %293 = vdwg.mxu0
    %v294 = vmax.f32 %v281, 0.0
    %v295 = vmax.f32 %v286, 0.0
    %v296 = vmax.f32 %v291, 0.0
    %298 = vset.pattern.permute.xlu0 0
    %299 = vperm.xlu0 %298, %v44
    %v300 = vpop.permute.xlu0 %299
    %303 = vset.pattern.permute.xlu0 0
    %304 = vperm.xlu0 %303, %v45
    %v305 = vpop.permute.xlu0 %304
    %v308 = vsel %vm204, %v42, 0
    %v311 = vsel %vm204, %v43, 0
    %313 = vmatprep.subr.mxu0 0.0
    %314 = vmatpush1.msra.mxu0 %v294
    %315 = vmatprep.subr.mxu0 0.0
    %316 = vmatpush1.msra.mxu0 %v295
    %317 = vmatprep.subr.mxu0 0.0
    %318 = vmatpush1.msra.mxu0 %v296
    %319 = vmatprep.subr.mxu0 0.0
    %320 = vmatpush1.msra.mxu0 0.0
    %321 = vmatprep.subr.mxu0 0.0
    %322 = vmatpush1.msra.mxu0 0.0
    %323 = vmatprep.subr.mxu0 0.0
    %324 = vmatpush1.msra.mxu0 0.0
    %325 = vmatprep.subr.mxu0 0.0
    %326 = vmatpush1.msra.mxu0 0.0
    %327 = vmatprep.subr.mxu0 0.0
    %328 = vmatpush1.msra.mxu0 0.0
    %329 = vmatprep.subr.mxu0 0.0
    %330 = vmatpush1.msra.mxu0 0.0
    %331 = vmatprep.subr.mxu0 0.0
    %332 = vmatpush1.msra.mxu0 0.0
    %333 = vmatprep.subr.mxu0 0.0
    %334 = vmatpush1.msra.mxu0 0.0
    %335 = vmatprep.subr.mxu0 0.0
    %336 = vmatpush1.msra.mxu0 0.0
    %337 = vmatprep.subr.mxu0 0.0
    %338 = vmatpush1.msra.mxu0 0.0
    %339 = vmatprep.subr.mxu0 0.0
    %340 = vmatpush1.msra.mxu0 0.0
    %341 = vmatprep.subr.mxu0 0.0
    %342 = vmatpush1.msra.mxu0 0.0
    %343 = vmatprep.subr.mxu0 0.0
    %344 = vmatpush1.msra.mxu0 0.0
    %345 = vmatprep.subr.mxu0 0.0
    %346 = vmatpush1.msra.mxu0 0.0
    %347 = vmatprep.subr.mxu0 0.0
    %348 = vmatpush1.msra.mxu0 0.0
    %349 = vmatprep.subr.mxu0 0.0
    %350 = vmatpush1.msra.mxu0 0.0
    %351 = vmatprep.subr.mxu0 0.0
    %352 = vmatpush1.msra.mxu0 0.0
    %353 = vmatprep.subr.mxu0 0.0
    %354 = vmatpush1.msra.mxu0 0.0
    %355 = vmatprep.subr.mxu0 0.0
    %356 = vmatpush1.msra.mxu0 0.0
    %357 = vmatprep.subr.mxu0 0.0
    %358 = vmatpush1.msra.mxu0 0.0
    %359 = vmatprep.subr.mxu0 0.0
    %360 = vmatpush1.msra.mxu0 0.0
    %361 = vmatprep.subr.mxu0 0.0
    %362 = vmatpush1.msra.mxu0 0.0
    %363 = vmatprep.subr.mxu0 0.0
    %364 = vmatpush1.msra.mxu0 0.0
    %365 = vmatprep.subr.mxu0 0.0
    %366 = vmatpush1.msra.mxu0 0.0
    %367 = vmatprep.subr.mxu0 0.0
    %368 = vmatpush1.msra.mxu0 0.0
    %369 = vmatprep.subr.mxu0 0.0
    %370 = vmatpush1.msra.mxu0 0.0
    %371 = vmatprep.subr.mxu0 0.0
    %372 = vmatpush1.msra.mxu0 0.0
    %373 = vmatprep.subr.mxu0 0.0
    %374 = vmatpush1.msra.mxu0 0.0
    %375 = vmatprep.subr.mxu0 0.0
    %376 = vmatpush1.msra.mxu0 0.0
    %377 = vmatprep.mubr.f32.mxu0 0.0
    %378 = vmatmul.mubr.f32.gmra.mrb[0].mxu0 %v308
    %v379 = vpop.f32.mrb[0].mxu0
    %v380 = vadd.f32 %v300, %v379
    %v381 = vpop.f32.mrb[0].mxu0
    %382 = vmatprep.mubr.f32.mxu0 0.0
    %383 = vmatmul.mubr.f32.gmra.mrb[0].mxu0 %v311
    %v384 = vpop.f32.mrb[0].mxu0
    %v385 = vadd.f32 %v305, %v384
    %v386 = vpop.f32.mrb[0].mxu0
    %387 = vdwg.mxu0
    %v388 = vmax.f32 %v380, 0.0
    %v389 = vmax.f32 %v385, 0.0
    %391 = vset.pattern.permute.xlu0 0
    %392 = vperm.xlu0 %391, %v46
    %v393 = vpop.permute.xlu0 %392
    %396 = vset.pattern.permute.xlu0 0
    %397 = vperm.xlu0 %396, %v47
    %v398 = vpop.permute.xlu0 %397
    %v400 = vmul.f32 %v393, %v388
    %v401 = vmul.f32 %v398, %v389
    %v402 = vadd.f32 %v400, %v401
    %v403 = vrot.slane %v402, 4
    %v404 = vadd.f32 %v402, %v403
    %v405 = vrot.slane %v404, 2
    %v406 = vadd.f32 %v404, %v405
    %v407 = vrot.slane %v406, 1
    %v408 = vadd.f32 %v406, %v407
    %410 = vset.pattern.permute.xlu0 0
    %411 = vperm.xlu0 %410, %v48
    %v412 = vpop.permute.xlu0 %411
    %v414 = vadd.f32 %v408, %v412
    %415 = vst [vmem:[%s2] sm:$0x1] %v414
    // Predicated region
    $region14: #{function_approximator1.1} parent=1 // pred_check
      _
    $region15: #{function_approximator1.1} parent=1 // pred_check_branch
      %417 = sbr.rel (0) target = $region17
    $region16: #{function_approximator1.1} parent=1 // pred_region
      _
    $region17: #{function_approximator1.1} parent=1 // pred_fallthru
      _
    // Predicated region
    $region18: #{function_approximator1.1} parent=1 // pred_check
      _
    $region19: #{function_approximator1.1} parent=1 // pred_check_branch
      %419 = sbr.rel (0) target = $region21
    $region20: #{function_approximator1.1} parent=1 // pred_region
      _
    $region21: #{function_approximator1.1} parent=1 // pred_fallthru
      _
    %420 = vsyncpa [#allocation3], 1

</llo_original>
